<compile_context>
chip_gen: v6e
topology: v6e:2x2x1
jax: 0.10.0
libtpu: 0.0.40
codegen_flags: <defaults>
</compile_context>

<pallas_src>
import jax
import jax.numpy as jnp
from jax.experimental import pallas as pl
from jax.experimental.pallas import tpu as pltpu


_TARGET_BLOCK_BYTES = 1 << 20    # ~1 MiB blocks: at/past the measured HBM roofline knee
_MIN_BLOCK_BYTES = 512 << 10     # never fragment below this while chasing step count
_MIN_GRID_STEPS = 8              # >= 4 pipelined iterations per TC on v7x (2 TCs/chip)


def _normrelu_kernel(x_ref, o_ref):
    # x_ref / o_ref: (bt, C, st, 128) lane-dense tile.
    # Channel axis (axis=1) is a leading block axis, so the max is an
    # elementwise VPU max across vregs (no XLU cross-lane reduction).
    x = x_ref[...]
    # Max over the ORIGINAL x (PyTorch semantics), keepdim over channels.
    # Max is exact in any dtype; do the reciprocal + multiply in f32 so bf16
    # inputs don't drift vs. PyTorch's true division (v5e has no bf16 EUP
    # anyway, and compute has ~8x headroom over the HBM roofline here).
    m = jnp.max(x, axis=1, keepdims=True).astype(jnp.float32)
    inv = pl.reciprocal(m, approx=False)      # one reciprocal per spatial position
    y = jnp.maximum(x, 0).astype(jnp.float32) * inv
    o_ref[...] = y.astype(o_ref.dtype)


def _largest_divisor_leq(n: int, cap: int) -> int:
    cap = max(1, min(n, cap))
    for d in range(cap, 0, -1):
        if n % d == 0:
            return d
    return 1


def _pick_tiling(B: int, C: int, S: int, itemsize: int):
    """Pick (bt, st) block sizes over the batch / spatial-row axes."""
    row_bytes = C * 128 * itemsize              # all channels of one spatial row
    sub = max(8, 32 // itemsize)                # sublane multiple: 8 f32 / 16 bf16 / 32 int8

    # Spatial tile: whole sample if it fits the budget, otherwise the largest
    # dtype-aligned row count that does (never silently fall back to full S).
    if S * row_bytes <= _TARGET_BLOCK_BYTES or S <= sub:
        st = S
    else:
        st = max(sub, (min(S, _TARGET_BLOCK_BYTES // row_bytes) // sub) * sub)

    # Batch tile: fold samples until the block budget is reached.
    bt = _largest_divisor_leq(B, max(1, _TARGET_BLOCK_BYTES // max(1, st * row_bytes)))

    # Guarantee enough grid steps for software pipelining (and so both v7x
    # TensorCores stream concurrently), but never fragment below the minimum
    # block size — tiny problems stay as a single cheap step.
    def steps(bt_, st_):
        return (B // bt_) * (-(-S // st_))

    while steps(bt, st) < _MIN_GRID_STEPS:
        if bt > 1 and (bt // 2) * st * row_bytes >= _MIN_BLOCK_BYTES:
            bt = _largest_divisor_leq(B, bt // 2)
            continue
        if st > sub:
            new_st = max(sub, ((st // 2) // sub) * sub)
            if new_st < st and bt * new_st * row_bytes >= _MIN_BLOCK_BYTES:
                st = new_st
                continue
        break

    return bt, st


def normrelu(x: jax.Array) -> jax.Array:
    """Pallas TPU implementation of normrelu forward. x: [B, C, H, W]."""
    B, C, H, W = x.shape
    HW = H * W
    itemsize = jnp.dtype(x.dtype).itemsize

    # Lane-dense layout: pad the flattened spatial axis up to a multiple of
    # 128 lanes so every store is a full unmasked `vst` regardless of H*W.
    # Pad value 1.0 keeps the (discarded) tail positions finite.
    HWp = -(-HW // 128) * 128
    S = HWp // 128
    x2 = x.reshape(B, C, HW)
    if HWp != HW:
        x2 = jnp.pad(x2, ((0, 0), (0, 0), (0, HWp - HW)), constant_values=1.0)
    x2 = x2.reshape(B, C, S, 128)

    bt, st = _pick_tiling(B, C, S, itemsize)
    grid = (B // bt, -(-S // st))
    block_bytes = bt * C * st * 128 * itemsize

    # BlockSpec double-buffers input + output (~4x block bytes resident); only
    # raise the scoped-VMEM limit when the block is genuinely large so the
    # default (16 MiB v5e / 32 MiB v6e+v7x) is otherwise left alone.
    vmem_needed = 4 * block_bytes + (2 << 20)
    vmem_limit = min(vmem_needed, 48 << 20) if vmem_needed > (16 << 20) else None

    out = pl.pallas_call(
        _normrelu_kernel,
        out_shape=jax.ShapeDtypeStruct((B, C, S, 128), x.dtype),
        grid=grid,
        in_specs=[pl.BlockSpec((bt, C, st, 128), lambda b, s: (b, 0, s, 0))],
        out_specs=pl.BlockSpec((bt, C, st, 128), lambda b, s: (b, 0, s, 0)),
        compiler_params=pltpu.CompilerParams(
            dimension_semantics=("parallel", "parallel"),
            vmem_limit_bytes=vmem_limit),
        cost_estimate=pl.CostEstimate(
            flops=3 * B * C * HW,
            transcendentals=B * HW,
            bytes_accessed=2 * B * C * HW * itemsize),
    )(x2)

    out = out.reshape(B, C, HWp)
    if HWp != HW:
        out = out[:, :, :HW]
    return out.reshape(B, C, H, W)


def normrelu_ref(x: jax.Array) -> jax.Array:
    """Pure-JAX reference mirroring the PyTorch module."""
    return jnp.maximum(x, 0.0) / jnp.max(x, axis=1, keepdims=True)


if __name__ == "__main__":
    key = jax.random.PRNGKey(0)
    # Small NCHW input: batch=2, channels=4, spatial=16x16 (HW=256, lane-dense).
    x = jax.random.normal(key, (2, 4, 16, 16), dtype=jnp.float32)
    # Shift so the per-position channel max is positive (typical post-conv
    # activations); zero/negative-max edge cases match PyTorch (NaN / sign
    # flip) but are not exercised here.
    x = x + 2.0

    out = jax.block_until_ready(normrelu(x))
    ref = normrelu_ref(x)
    assert out.shape == ref.shape and out.dtype == ref.dtype
    assert jnp.allclose(out, ref, atol=1e-6, rtol=1e-6)

    # Also exercise the pad-to-128-lanes path (H*W not a multiple of 128).
    x_odd = jax.random.normal(jax.random.PRNGKey(1), (2, 4, 10, 10),
                              dtype=jnp.float32) + 2.0
    out_odd = jax.block_until_ready(normrelu(x_odd))
    assert jnp.allclose(out_odd, normrelu_ref(x_odd), atol=1e-6, rtol=1e-6)

    print("KERNEL_OK")
</pallas_src>

<mosaic_0001>
module attributes {stable_mosaic.version = 11 : i64} {
  func.func @_normrelu_kernel(%arg0: i32, %arg1: i32, %arg2: memref<2x4x2x128xf32, #tpu.memory_space<vmem>>, %arg3: memref<2x4x2x128xf32, #tpu.memory_space<vmem>>) attributes {dimension_semantics = [#tpu.dimension_semantics<parallel>, #tpu.dimension_semantics<parallel>], iteration_bounds = array<i64: 1, 1>, scalar_prefetch = 0 : i64, scratch_operands = 0 : i64, tpu.core_type = #tpu.core_type<tc>, window_params = [{transform_indices = @transform_0, window_bounds = array<i64: 2, 4, 2, 128>}, {transform_indices = @transform_1, window_bounds = array<i64: 2, 4, 2, 128>}]} {
    %c0 = arith.constant 0 : index
    %c0_0 = arith.constant 0 : index
    %c0_1 = arith.constant 0 : index
    %c0_2 = arith.constant 0 : index
    %0 = vector.load %arg2[%c0, %c0_0, %c0_1, %c0_2] : memref<2x4x2x128xf32, #tpu.memory_space<vmem>>, vector<2x4x2x128xf32>
    %cst = arith.constant dense<0xFF800000> : vector<2x2x128xf32>
    %1 = vector.multi_reduction <maximumf>, %0, %cst [1] : vector<2x4x2x128xf32> to vector<2x2x128xf32>
    %2 = vector.shape_cast %1 : vector<2x2x128xf32> to vector<2x1x2x128xf32>
    %3 = tpu.reciprocal %2 : vector<2x1x2x128xf32> -> vector<2x1x2x128xf32>
    %cst_3 = arith.constant 0.000000e+00 : f32
    %4 = vector.broadcast %cst_3 : f32 to vector<2x4x2x128xf32>
    %5 = arith.maximumf %0, %4 : vector<2x4x2x128xf32>
    %6 = vector.broadcast %3 : vector<2x1x2x128xf32> to vector<2x4x2x128xf32>
    %7 = arith.mulf %5, %6 : vector<2x4x2x128xf32>
    %c0_4 = arith.constant 0 : index
    %c0_5 = arith.constant 0 : index
    %c0_6 = arith.constant 0 : index
    %c0_7 = arith.constant 0 : index
    %8 = vector.load %arg3[%c0_4, %c0_5, %c0_6, %c0_7] : memref<2x4x2x128xf32, #tpu.memory_space<vmem>>, vector<2x4x2x128xf32>
    tpu.vector_store %arg3[%c0_4, %c0_5, %c0_6, %c0_7], %7 {strides = array<i32>} : memref<2x4x2x128xf32, #tpu.memory_space<vmem>>, vector<2x4x2x128xf32>,
    return
  }
  func.func @transform_0(%arg0: i32, %arg1: i32) -> (i32, i32, i32, i32) {
    %c0_i32 = arith.constant 0 : i32
    %c0_i32_0 = arith.constant 0 : i32
    %c0_i32_1 = arith.constant 0 : i32
    return %arg0, %c0_i32, %arg1, %c0_i32_0 : i32, i32, i32, i32
  }
  func.func @transform_1(%arg0: i32, %arg1: i32) -> (i32, i32, i32, i32) {
    %c0_i32 = arith.constant 0 : i32
    %c0_i32_0 = arith.constant 0 : i32
    %c0_i32_1 = arith.constant 0 : i32
    return %arg0, %c0_i32, %arg1, %c0_i32_0 : i32, i32, i32, i32
  }
}

</mosaic_0001>

<llo_original>
// kernel: tpu_custom_call.1
$region0: #{tpu_custom_call.1}
  #allocation0 [shape = 'u32[]', space=smem, size = 0x4, offset = 0x4, fixed_abs, tag = 'smem constant byte address 0x4 - core index']
  #allocation1 [shape = 'u32[144,128]{1,0:T(1,128)}', space=vmem, size = 0x12000, scoped, tag = 'internal scratch']
  %s0 = inlined_call_operand.hbm [shape: f32[2,4,2,128], index: 0, kind: input, shape index: {}]
  %s1 = inlined_call_operand.hbm [shape: f32[2,4,2,128], index: 1, kind: output, shape index: {}]
  %s2 = sld [smem:[#allocation0]]
  $region18: #{tpu_custom_call.1} parent=0
    _
  %s4 = ssub.s32 1, %s2
  %s5 = scalar_select 0, %s4, %s2
  $region1: #{tpu_custom_call.1} parent=0
    #allocation2 [shape = 'u8[8192]{0}', space=vmem, size = 0x2000, scoped, tag = 'input window, operand 0, single buffered']
    #allocation3 [shape = 's32[1]{0}', space=sflag, size = 0x4, scoped, tag = 'scoped memory for tpu_custom_call.1']
    #allocation4 [shape = 's32[1]{0}', space=sflag, size = 0x4, scoped, tag = 'scoped memory for tpu_custom_call.1']
    #allocation5 [shape = 'u8[8192]{0}', space=vmem, size = 0x2000, scoped, tag = 'output window, operand 0, single buffered']
    %6 = vsyncpa [#allocation3], 0
    %7 = vsyncpa [#allocation4], 0
    // Predicated region
    $region2: #{tpu_custom_call.1} parent=1 // pred_check
      _
    $region3: #{tpu_custom_call.1} parent=1 // pred_check_branch
      %9 = sbr.rel (0) target = $region5
    $region4: #{tpu_custom_call.1} parent=1 // pred_region
      %s11 = ssub.s32 256, 256
      %12 = vsyncadd [#allocation3], %s11
      %s13 = sshll.u32 [#allocation2], 4
      %s14 = int_to_ptr.vmem [resolvable:$true] %s13
      %19 = dma.hbm_to_vmem [thread:$0]  %s0, 256, %s14, [#allocation3], 32, 32, 2
    $region5: #{tpu_custom_call.1} parent=1 // pred_fallthru
      _
    // Predicated region
    $region6: #{tpu_custom_call.1} parent=1 // pred_check
      _
    $region7: #{tpu_custom_call.1} parent=1 // pred_check_branch
      %21 = sbr.rel (0) target = $region9
    $region8: #{tpu_custom_call.1} parent=1 // pred_region
      %22 = dma.done [#allocation3], 256
    $region9: #{tpu_custom_call.1} parent=1 // pred_fallthru
      _
    %v23 = vld [vmem:[#allocation2] sm:$0x3]
    %v24 = vld [vmem:[#allocation2 + $0x2] sm:$0x3]
    %v25 = vld [vmem:[#allocation2 + $0x4] sm:$0x3]
    %v26 = vld [vmem:[#allocation2 + $0x6] sm:$0x3]
    %v27 = vld [vmem:[#allocation2 + $0x8] sm:$0x3]
    %v28 = vld [vmem:[#allocation2 + $0xa] sm:$0x3]
    %v29 = vld [vmem:[#allocation2 + $0xc] sm:$0x3]
    %v30 = vld [vmem:[#allocation2 + $0xe] sm:$0x3]
    %vm31 = vcmask 1041408
    %v32 = vsel %vm31, %v23, -inf
    %v33 = vsel %vm31, %v24, -inf
    %v34 = vsel %vm31, %v25, -inf
    %v35 = vmax.f32 %v32, %v34
    %v36 = vsel %vm31, %v26, -inf
    %v37 = vmax.f32 %v33, %v36
    %v38 = vmax.f32 %v35, %v37
    %v39 = vsel %vm31, %v27, -inf
    %v40 = vsel %vm31, %v28, -inf
    %v41 = vsel %vm31, %v29, -inf
    %v42 = vmax.f32 %v39, %v41
    %v43 = vsel %vm31, %v30, -inf
    %v44 = vmax.f32 %v40, %v43
    %v45 = vmax.f32 %v42, %v44
    %v46 = vrcp.pop %v38
    %v47 = vrcp.pop %v45
    %v48 = vmax.f32 %v23, 0.0
    %v49 = vmax.f32 %v24, 0.0
    %v50 = vmax.f32 %v25, 0.0
    %v51 = vmax.f32 %v26, 0.0
    %v52 = vmax.f32 %v27, 0.0
    %v53 = vmax.f32 %v28, 0.0
    %v54 = vmax.f32 %v29, 0.0
    %v55 = vmax.f32 %v30, 0.0
    %v56 = vmul.f32 %v48, %v46
    %v57 = vmul.f32 %v49, %v46
    %v58 = vmul.f32 %v50, %v46
    %v59 = vmul.f32 %v51, %v46
    %v60 = vmul.f32 %v52, %v47
    %v61 = vmul.f32 %v53, %v47
    %v62 = vmul.f32 %v54, %v47
    %v63 = vmul.f32 %v55, %v47
    %64 = vst [vmem:[#allocation5] sm:$0x3] %v56
    %65 = vst [vmem:[#allocation5 + $0x2] sm:$0x3] %v57
    %66 = vst [vmem:[#allocation5 + $0x4] sm:$0x3] %v58
    %67 = vst [vmem:[#allocation5 + $0x6] sm:$0x3] %v59
    %68 = vst [vmem:[#allocation5 + $0x8] sm:$0x3] %v60
    %69 = vst [vmem:[#allocation5 + $0xa] sm:$0x3] %v61
    %70 = vst [vmem:[#allocation5 + $0xc] sm:$0x3] %v62
    %71 = vst [vmem:[#allocation5 + $0xe] sm:$0x3] %v63
    // Predicated region
    $region10: #{tpu_custom_call.1} parent=1 // pred_check
      _
    $region11: #{tpu_custom_call.1} parent=1 // pred_check_branch
      %73 = sbr.rel (0) target = $region13
    $region12: #{tpu_custom_call.1} parent=1 // pred_region
      %s75 = ssub.s32 256, 256
      %76 = vsyncadd [#allocation4], %s75
      %s77 = sshll.u32 [#allocation5], 4
      %s78 = int_to_ptr.vmem [resolvable:$true] %s77
      %83 = dma.vmem_to_hbm [thread:$0]  %s78, 256, %s1, [#allocation4], 32, 32, 2
    $region13: #{tpu_custom_call.1} parent=1 // pred_fallthru
      _
    // Predicated region
    $region14: #{tpu_custom_call.1} parent=1 // pred_check
      _
    $region15: #{tpu_custom_call.1} parent=1 // pred_check_branch
      %85 = sbr.rel (0) target = $region17
    $region16: #{tpu_custom_call.1} parent=1 // pred_region
      %86 = dma.done [#allocation4], 256
    $region17: #{tpu_custom_call.1} parent=1 // pred_fallthru
      _
    %87 = vsyncpa [#allocation3], 1
    %88 = vsyncpa [#allocation4], 1

</llo_original>
